<compile_context>
chip_gen: v5e
topology: v5e:2x2
jax: 0.10.0
libtpu: 0.0.40
codegen_flags: <defaults>
</compile_context>

<pallas_src>
import jax
import jax.numpy as jnp
from jax.experimental import pallas as pl
from jax.experimental.pallas import tpu as pltpu


def _round_up(x, m):
    return ((x + m - 1) // m) * m


def _qnetwork_kernel(state_ref, w1_ref, b1_ref, w2_ref, b2_ref,
                     wh_ref, bh_ref, out_ref):
    """Fused forward: fc1->relu->fc2->relu->fused dueling head (single matmul)."""
    x = state_ref[...]                                                 # [TB, S]

    # fc1 + ReLU (accumulate in f32 regardless of matmul input dtype)
    h1 = jnp.dot(x, w1_ref[...], preferred_element_type=jnp.float32) + b1_ref[...]
    h1 = jnp.maximum(h1, 0.0)                                          # [TB, F1] f32
    h1 = h1.astype(w2_ref.dtype)                                       # no-op in f32 path

    # fc2 + ReLU
    h2 = jnp.dot(h1, w2_ref[...], preferred_element_type=jnp.float32) + b2_ref[...]
    h2 = jnp.maximum(h2, 0.0)                                          # [TB, F2] f32
    h2 = h2.astype(wh_ref.dtype)

    # Fused dueling head: w_head = (wa - mean_cols(wa)) + wv, b_head likewise,
    # so a single matmul produces  value + centered_advantage  directly.
    out = jnp.dot(h2, wh_ref[...], preferred_element_type=jnp.float32) + bh_ref[...]
    out_ref[...] = out.astype(out_ref.dtype)                           # [TB, A]


def qnetwork_forward(state, fused, *, block_b=1024, matmul_dtype=None):
    """state: [B, state_size] f32.  fused: dict from fuse_head_params().

    block_b: batch tile (multiple of 8).  TB in the 512-2048 range amortizes
    per-step overhead and the masked 4-lane-wide output store; keep TB small
    enough that 2x(state tile + out tile + intermediates) fits VMEM — trivially
    true here even on v7x's 64 MiB.
    matmul_dtype: e.g. jnp.bfloat16 on v6e/v7x to run the MXU at full rate and
    halve state-tile DMA bytes; accumulation stays f32.
    """
    B, S = state.shape
    w1, b1 = fused["w1"], fused["b1"]
    w2, b2 = fused["w2"], fused["b2"]
    wh, bh = fused["w_head"], fused["b_head"]
    A = wh.shape[1]
    F1, F2 = w1.shape[1], w2.shape[1]

    if matmul_dtype is not None:
        state = state.astype(matmul_dtype)
        w1 = w1.astype(matmul_dtype)
        w2 = w2.astype(matmul_dtype)
        wh = wh.astype(matmul_dtype)

    # Batch tile: multiple of 8 (sublane), capped by block_b; pad batch to a
    # multiple of TB (zero rows are discarded after the call).
    TB = min(block_b, _round_up(B, 8))
    Bp = _round_up(B, TB)
    if Bp != B:
        state = jnp.pad(state, ((0, Bp - B), (0, 0)))
    grid = (Bp // TB,)

    args = (state, w1, b1, w2, b2, wh, bh)

    # Weights/biases: full block, constant index_map -> VMEM-resident across
    # grid steps (no per-step re-DMA).  State/out: tiled along batch.
    resident = lambda arr: pl.BlockSpec(arr.shape, lambda i: (0, 0))
    in_specs = [pl.BlockSpec((TB, S), lambda i: (i, 0))] + [resident(a) for a in args[1:]]
    out_specs = pl.BlockSpec((TB, A), lambda i: (i, 0))

    flops = 2 * Bp * (S * F1 + F1 * F2 + F2 * A)
    bytes_accessed = Bp * A * 4 + sum(int(a.size) * a.dtype.itemsize for a in args)

    out = pl.pallas_call(
        _qnetwork_kernel,
        out_shape=jax.ShapeDtypeStruct((Bp, A), jnp.float32),
        grid=grid,
        in_specs=in_specs,
        out_specs=out_specs,
        compiler_params=pltpu.CompilerParams(
            dimension_semantics=("parallel",)),      # shard batch across TCs (v7x)
        cost_estimate=pl.CostEstimate(
            flops=flops, transcendentals=0, bytes_accessed=bytes_accessed),
    )(*args)

    return out[:B] if Bp != B else out


def init_params(key, state_size, action_size, fc1_units=64, fc2_units=64):
    """PyTorch nn.Linear default init (U[-1/sqrt(fan_in), 1/sqrt(fan_in)]).
    Weights stored transposed: [in_features, out_features]; biases [1, out]."""
    def linear(k, fan_in, fan_out):
        kw, kb = jax.random.split(k)
        bound = 1.0 / jnp.sqrt(jnp.float32(fan_in))
        w = jax.random.uniform(kw, (fan_in, fan_out), jnp.float32, -bound, bound)
        b = jax.random.uniform(kb, (1, fan_out), jnp.float32, -bound, bound)
        return w, b

    k1, k2, k3, k4 = jax.random.split(key, 4)
    w1, b1 = linear(k1, state_size, fc1_units)
    w2, b2 = linear(k2, fc1_units, fc2_units)
    wa, ba = linear(k3, fc2_units, action_size)
    wv, bv = linear(k4, fc2_units, 1)
    return {"w1": w1, "b1": b1, "w2": w2, "b2": b2,
            "wa": wa, "ba": ba, "wv": wv, "bv": bv}


def fuse_head_params(p):
    """Host-side, one-time fold of the dueling combine into the head weights.

    adv_centered = h2 @ (wa - mean_cols(wa)) + (ba - mean(ba))   (centering
    commutes with the linear layer), and  out = value + adv_centered  is also
    linear in h2, so  w_head = wa_centered + wv (broadcast),  b_head = ba_c + bv.
    """
    wa_c = p["wa"] - jnp.mean(p["wa"], axis=1, keepdims=True)
    ba_c = p["ba"] - jnp.mean(p["ba"], axis=1, keepdims=True)
    w_head = wa_c + p["wv"]                      # [F2, A] + [F2, 1]
    b_head = ba_c + p["bv"]                      # [1, A]  + [1, 1]
    return {"w1": p["w1"], "b1": p["b1"], "w2": p["w2"], "b2": p["b2"],
            "w_head": w_head, "b_head": b_head}


def qnetwork_ref(state, p):
    """Pure-JAX reference matching the original PyTorch forward exactly."""
    h1 = jnp.maximum(state @ p["w1"] + p["b1"], 0.0)
    h2 = jnp.maximum(h1 @ p["w2"] + p["b2"], 0.0)
    adv = h2 @ p["wa"] + p["ba"]
    adv = adv - adv.mean(axis=1, keepdims=True)
    val = h2 @ p["wv"] + p["bv"]
    return val + adv


if __name__ == "__main__":
    key = jax.random.PRNGKey(0)
    kp, kx1, kx2 = jax.random.split(key, 3)

    state_size, action_size = 16, 4
    params = init_params(kp, state_size, action_size, fc1_units=64, fc2_units=64)
    fused = fuse_head_params(params)

    # Small batch: single grid step.
    s_small = jax.random.normal(kx1, (8, state_size), dtype=jnp.float32)
    out_small = jax.block_until_ready(qnetwork_forward(s_small, fused))
    ref_small = qnetwork_ref(s_small, params)
    assert out_small.shape == (8, action_size)
    assert jnp.allclose(out_small, ref_small, atol=1e-4, rtol=1e-4)

    # Multi-step batch grid + padding path (B=100 padded to 128, TB=32, grid=(4,)).
    s_grid = jax.random.normal(kx2, (100, state_size), dtype=jnp.float32)
    out_grid = jax.block_until_ready(qnetwork_forward(s_grid, fused, block_b=32))
    ref_grid = qnetwork_ref(s_grid, params)
    assert out_grid.shape == (100, action_size)
    assert jnp.allclose(out_grid, ref_grid, atol=1e-4, rtol=1e-4)

    # bf16 matmul-input path (v6e/v7x): smoke test, f32 accumulation.
    out_bf16 = jax.block_until_ready(
        qnetwork_forward(s_grid, fused, block_b=32, matmul_dtype=jnp.bfloat16))
    assert out_bf16.shape == (100, action_size)
    assert bool(jnp.isfinite(out_bf16).all())

    print("KERNEL_OK")
</pallas_src>

<mosaic_0001>
module attributes {stable_mosaic.version = 11 : i64} {
  func.func @_qnetwork_kernel(%arg0: i32, %arg1: memref<8x16xf32, #tpu.memory_space<vmem>>, %arg2: memref<16x64xf32, #tpu.memory_space<vmem>>, %arg3: memref<1x64xf32, #tpu.memory_space<vmem>>, %arg4: memref<64x64xf32, #tpu.memory_space<vmem>>, %arg5: memref<1x64xf32, #tpu.memory_space<vmem>>, %arg6: memref<64x4xf32, #tpu.memory_space<vmem>>, %arg7: memref<1x4xf32, #tpu.memory_space<vmem>>, %arg8: memref<8x4xf32, #tpu.memory_space<vmem>>) attributes {dimension_semantics = [#tpu.dimension_semantics<parallel>], iteration_bounds = array<i64: 1>, scalar_prefetch = 0 : i64, scratch_operands = 0 : i64, tpu.core_type = #tpu.core_type<tc>, window_params = [{transform_indices = @transform_0, window_bounds = array<i64: 8, 16>}, {pipeline_mode = #tpu.pipeline_mode<synchronous>, transform_indices = @transform_1, window_bounds = array<i64: 16, 64>}, {pipeline_mode = #tpu.pipeline_mode<synchronous>, transform_indices = @transform_2, window_bounds = array<i64: 1, 64>}, {pipeline_mode = #tpu.pipeline_mode<synchronous>, transform_indices = @transform_3, window_bounds = array<i64: 64, 64>}, {pipeline_mode = #tpu.pipeline_mode<synchronous>, transform_indices = @transform_4, window_bounds = array<i64: 1, 64>}, {pipeline_mode = #tpu.pipeline_mode<synchronous>, transform_indices = @transform_5, window_bounds = array<i64: 64, 4>}, {pipeline_mode = #tpu.pipeline_mode<synchronous>, transform_indices = @transform_6, window_bounds = array<i64: 1, 4>}, {transform_indices = @transform_7, window_bounds = array<i64: 8, 4>}]} {
    %c0 = arith.constant 0 : index
    %c0_0 = arith.constant 0 : index
    %0 = vector.load %arg1[%c0, %c0_0] : memref<8x16xf32, #tpu.memory_space<vmem>>, vector<8x16xf32>
    %c0_1 = arith.constant 0 : index
    %c0_2 = arith.constant 0 : index
    %1 = vector.load %arg2[%c0_1, %c0_2] : memref<16x64xf32, #tpu.memory_space<vmem>>, vector<16x64xf32>
    %cst = arith.constant dense<0.000000e+00> : vector<8x64xf32>
    %2 = tpu.matmul %0, %1, %cst {dimension_numbers = #tpu.dot_dimension_numbers<[1], [0], [0], [1], [0, 0, 1, 1], [], []>} : vector<8x16xf32>, vector<16x64xf32>, vector<8x64xf32> -> vector<8x64xf32>
    %c0_3 = arith.constant 0 : index
    %c0_4 = arith.constant 0 : index
    %3 = vector.load %arg3[%c0_3, %c0_4] : memref<1x64xf32, #tpu.memory_space<vmem>>, vector<1x64xf32>
    %4 = vector.broadcast %3 : vector<1x64xf32> to vector<8x64xf32>
    %5 = arith.addf %2, %4 : vector<8x64xf32>
    %cst_5 = arith.constant 0.000000e+00 : f32
    %6 = vector.broadcast %cst_5 : f32 to vector<8x64xf32>
    %7 = arith.maximumf %5, %6 : vector<8x64xf32>
    %c0_6 = arith.constant 0 : index
    %c0_7 = arith.constant 0 : index
    %8 = vector.load %arg4[%c0_6, %c0_7] : memref<64x64xf32, #tpu.memory_space<vmem>>, vector<64x64xf32>
    %cst_8 = arith.constant dense<0.000000e+00> : vector<8x64xf32>
    %9 = tpu.matmul %7, %8, %cst_8 {dimension_numbers = #tpu.dot_dimension_numbers<[1], [0], [0], [1], [0, 0, 1, 1], [], []>} : vector<8x64xf32>, vector<64x64xf32>, vector<8x64xf32> -> vector<8x64xf32>
    %c0_9 = arith.constant 0 : index
    %c0_10 = arith.constant 0 : index
    %10 = vector.load %arg5[%c0_9, %c0_10] : memref<1x64xf32, #tpu.memory_space<vmem>>, vector<1x64xf32>
    %11 = vector.broadcast %10 : vector<1x64xf32> to vector<8x64xf32>
    %12 = arith.addf %9, %11 : vector<8x64xf32>
    %cst_11 = arith.constant 0.000000e+00 : f32
    %13 = vector.broadcast %cst_11 : f32 to vector<8x64xf32>
    %14 = arith.maximumf %12, %13 : vector<8x64xf32>
    %c0_12 = arith.constant 0 : index
    %c0_13 = arith.constant 0 : index
    %15 = vector.load %arg6[%c0_12, %c0_13] : memref<64x4xf32, #tpu.memory_space<vmem>>, vector<64x4xf32>
    %cst_14 = arith.constant dense<0.000000e+00> : vector<8x4xf32>
    %16 = tpu.matmul %14, %15, %cst_14 {dimension_numbers = #tpu.dot_dimension_numbers<[1], [0], [0], [1], [0, 0, 1, 1], [], []>} : vector<8x64xf32>, vector<64x4xf32>, vector<8x4xf32> -> vector<8x4xf32>
    %c0_15 = arith.constant 0 : index
    %c0_16 = arith.constant 0 : index
    %17 = vector.load %arg7[%c0_15, %c0_16] : memref<1x4xf32, #tpu.memory_space<vmem>>, vector<1x4xf32>
    %18 = vector.broadcast %17 : vector<1x4xf32> to vector<8x4xf32>
    %19 = arith.addf %16, %18 : vector<8x4xf32>
    %c0_17 = arith.constant 0 : index
    %c0_18 = arith.constant 0 : index
    %20 = vector.load %arg8[%c0_17, %c0_18] : memref<8x4xf32, #tpu.memory_space<vmem>>, vector<8x4xf32>
    tpu.vector_store %arg8[%c0_17, %c0_18], %19 {strides = array<i32>} : memref<8x4xf32, #tpu.memory_space<vmem>>, vector<8x4xf32>,
    return
  }
  func.func @transform_0(%arg0: i32) -> (i32, i32) {
    %c0_i32 = arith.constant 0 : i32
    %c0_i32_0 = arith.constant 0 : i32
    return %arg0, %c0_i32 : i32, i32
  }
  func.func @transform_1(%arg0: i32) -> (i32, i32) {
    %c0_i32 = arith.constant 0 : i32
    %c0_i32_0 = arith.constant 0 : i32
    %c0_i32_1 = arith.constant 0 : i32
    return %c0_i32, %c0_i32_0 : i32, i32
  }
  func.func @transform_2(%arg0: i32) -> (i32, i32) {
    %c0_i32 = arith.constant 0 : i32
    %c0_i32_0 = arith.constant 0 : i32
    %c0_i32_1 = arith.constant 0 : i32
    return %c0_i32, %c0_i32_0 : i32, i32
  }
  func.func @transform_3(%arg0: i32) -> (i32, i32) {
    %c0_i32 = arith.constant 0 : i32
    %c0_i32_0 = arith.constant 0 : i32
    %c0_i32_1 = arith.constant 0 : i32
    return %c0_i32, %c0_i32_0 : i32, i32
  }
  func.func @transform_4(%arg0: i32) -> (i32, i32) {
    %c0_i32 = arith.constant 0 : i32
    %c0_i32_0 = arith.constant 0 : i32
    %c0_i32_1 = arith.constant 0 : i32
    return %c0_i32, %c0_i32_0 : i32, i32
  }
  func.func @transform_5(%arg0: i32) -> (i32, i32) {
    %c0_i32 = arith.constant 0 : i32
    %c0_i32_0 = arith.constant 0 : i32
    %c0_i32_1 = arith.constant 0 : i32
    return %c0_i32, %c0_i32_0 : i32, i32
  }
  func.func @transform_6(%arg0: i32) -> (i32, i32) {
    %c0_i32 = arith.constant 0 : i32
    %c0_i32_0 = arith.constant 0 : i32
    %c0_i32_1 = arith.constant 0 : i32
    return %c0_i32, %c0_i32_0 : i32, i32
  }
  func.func @transform_7(%arg0: i32) -> (i32, i32) {
    %c0_i32 = arith.constant 0 : i32
    %c0_i32_0 = arith.constant 0 : i32
    return %arg0, %c0_i32 : i32, i32
  }
}

</mosaic_0001>

<llo_original>
// kernel: tpu_custom_call.1
$region0: #{tpu_custom_call.1}
  #allocation0 [shape = 'u32[]', space=smem, size = 0x4, offset = 0x4, fixed_abs, tag = 'smem constant byte address 0x4 - core index']
  #allocation1 [shape = 'u32[72,128]{1,0:T(1,128)}', space=vmem, size = 0x9000, scoped, tag = 'internal scratch']
  %s0 = inlined_call_operand.hbm [shape: f32[8,16], index: 0, kind: input, shape index: {}]
  %s1 = inlined_call_operand.hbm [shape: f32[16,64], index: 1, kind: input, shape index: {}]
  %s2 = inlined_call_operand.vmem [shape: f32[1,64], index: 2, kind: input, shape index: {}]
  %s3 = inlined_call_operand.vmem [shape: f32[64,64], index: 3, kind: input, shape index: {}]
  %s4 = inlined_call_operand.vmem [shape: f32[1,64], index: 4, kind: input, shape index: {}]
  %s5 = inlined_call_operand.vmem [shape: f32[64,4], index: 5, kind: input, shape index: {}]
  %s6 = inlined_call_operand.vmem [shape: f32[1,4], index: 6, kind: input, shape index: {}]
  %s7 = inlined_call_operand.vmem [shape: f32[8,4], index: 7, kind: output, shape index: {}]
  %s8 = sld [smem:[#allocation0]]
  $region46: #{tpu_custom_call.1} parent=0
    _
  %s10 = ssub.s32 1, %s8
  %s11 = scalar_select 0, %s10, %s8
  $region1: #{tpu_custom_call.1} parent=0
    #allocation2 [shape = 'u8[4096]{0}', space=vmem, size = 0x1000, scoped, tag = 'input window, operand 0, single buffered']
    #allocation3 [shape = 's32[1]{0}', space=sflag, size = 0x4, scoped, tag = 'scoped memory for tpu_custom_call.1']
    #allocation4 [shape = 'u8[8192]{0}', space=vmem, size = 0x2000, scoped, tag = 'input window, operand 1, single buffered']
    #allocation5 [shape = 's32[1]{0}', space=sflag, size = 0x4, scoped, tag = 'scoped memory for tpu_custom_call.1']
    %12 = vsyncpa [#allocation3], 0
    %13 = vsyncpa [#allocation5], 0
    // Predicated region
    $region2: #{tpu_custom_call.1} parent=1 // pred_check
      _
    $region3: #{tpu_custom_call.1} parent=1 // pred_check_branch
      %15 = sbr.rel (0) target = $region5
    $region4: #{tpu_custom_call.1} parent=1 // pred_region
      %17 = vsyncadd [#allocation3], 0
      %s19 = sshll.u32 %s0, 4
      %s20 = int_to_ptr.hbm [resolvable:$true] %s19
      %s21 = sshll.u32 [#allocation2], 4
      %s22 = int_to_ptr.vmem [resolvable:$true] %s21
      %24 = dma.hbm_to_vmem [thread:$0]  %s20, 128, %s22, [#allocation3]
    $region5: #{tpu_custom_call.1} parent=1 // pred_fallthru
      _
    // Predicated region
    $region6: #{tpu_custom_call.1} parent=1 // pred_check
      _
    $region7: #{tpu_custom_call.1} parent=1 // pred_check_branch
      %26 = sbr.rel (0) target = $region9
    $region8: #{tpu_custom_call.1} parent=1 // pred_region
      %28 = vsyncadd [#allocation5], 0
      %s29 = sshll.u32 %s1, 4
      %s30 = int_to_ptr.hbm [resolvable:$true] %s29
      %s31 = sshll.u32 [#allocation4], 4
      %s32 = int_to_ptr.vmem [resolvable:$true] %s31
      %37 = dma.hbm_to_vmem [thread:$0]  %s30, 256, %s32, [#allocation5], 128, 128, 8
    $region9: #{tpu_custom_call.1} parent=1 // pred_fallthru
      _
    // Predicated region
    $region10: #{tpu_custom_call.1} parent=1 // pred_check
      _
    $region11: #{tpu_custom_call.1} parent=1 // pred_check_branch
      %39 = sbr.rel (0) target = $region13
    $region12: #{tpu_custom_call.1} parent=1 // pred_region
      _
    $region13: #{tpu_custom_call.1} parent=1 // pred_fallthru
      _
    // Predicated region
    $region14: #{tpu_custom_call.1} parent=1 // pred_check
      _
    $region15: #{tpu_custom_call.1} parent=1 // pred_check_branch
      %41 = sbr.rel (0) target = $region17
    $region16: #{tpu_custom_call.1} parent=1 // pred_region
      _
    $region17: #{tpu_custom_call.1} parent=1 // pred_fallthru
      _
    // Predicated region
    $region18: #{tpu_custom_call.1} parent=1 // pred_check
      _
    $region19: #{tpu_custom_call.1} parent=1 // pred_check_branch
      %43 = sbr.rel (0) target = $region21
    $region20: #{tpu_custom_call.1} parent=1 // pred_region
      _
    $region21: #{tpu_custom_call.1} parent=1 // pred_fallthru
      _
    // Predicated region
    $region22: #{tpu_custom_call.1} parent=1 // pred_check
      _
    $region23: #{tpu_custom_call.1} parent=1 // pred_check_branch
      %45 = sbr.rel (0) target = $region25
    $region24: #{tpu_custom_call.1} parent=1 // pred_region
      _
    $region25: #{tpu_custom_call.1} parent=1 // pred_fallthru
      _
    // Predicated region
    $region26: #{tpu_custom_call.1} parent=1 // pred_check
      _
    $region27: #{tpu_custom_call.1} parent=1 // pred_check_branch
      %47 = sbr.rel (0) target = $region29
    $region28: #{tpu_custom_call.1} parent=1 // pred_region
      _
    $region29: #{tpu_custom_call.1} parent=1 // pred_fallthru
      _
    // Predicated region
    $region30: #{tpu_custom_call.1} parent=1 // pred_check
      _
    $region31: #{tpu_custom_call.1} parent=1 // pred_check_branch
      %49 = sbr.rel (0) target = $region33
    $region32: #{tpu_custom_call.1} parent=1 // pred_region
      %51 = dma.done [#allocation3], 128
    $region33: #{tpu_custom_call.1} parent=1 // pred_fallthru
      _
    // Predicated region
    $region34: #{tpu_custom_call.1} parent=1 // pred_check
      _
    $region35: #{tpu_custom_call.1} parent=1 // pred_check_branch
      %53 = sbr.rel (0) target = $region37
    $region36: #{tpu_custom_call.1} parent=1 // pred_region
      %55 = dma.done [#allocation5], 256
    $region37: #{tpu_custom_call.1} parent=1 // pred_fallthru
      _
    %v56 = vld [vmem:[#allocation2] sm:$0xff]
    %v57 = vld [vmem:[#allocation4] sm:$0xff]
    %v58 = vld [vmem:[#allocation4 + $0x8] sm:$0xff]
    %v59 = vld [vmem:[%s2] sm:$0x1]
    %v61 = vperm.slane %v59, 0
    %vm63 = vcmask 130048
    %v65 = vsel %vm63, %v56, 0
    %67 = vmatpush.msra.mxu0 0.0
    %68 = vmatpush.msra.mxu0 0.0
    %69 = vmatpush.msra.mxu0 0.0
    %70 = vmatpush.msra.mxu0 0.0
    %71 = vmatpush.msra.mxu0 0.0
    %72 = vmatpush.msra.mxu0 0.0
    %73 = vmatpush.msra.mxu0 0.0
    %74 = vmatpush.msra.mxu0 0.0
    %75 = vmatpush.msra.mxu0 0.0
    %76 = vmatpush.msra.mxu0 0.0
    %77 = vmatpush.msra.mxu0 0.0
    %78 = vmatpush.msra.mxu0 0.0
    %79 = vmatpush.msra.mxu0 0.0
    %80 = vmatpush.msra.mxu0 0.0
    %81 = vmatpush.msra.mxu0 %v58
    %82 = vmatpush.msra.mxu0 %v57
    %83 = vmatmul.f32.gmra.mxu0 %v65
    %v84 = vpop.f32.mrf.mxu0
    %v85 = vadd.f32 %v61, %v84
    %86 = vdwg.mxu0
    %v87 = vmax.f32 %v85, 0.0
    %v88 = vld [vmem:[%s3] sm:$0xff]
    %v89 = vld [vmem:[%s3 + $0x8] sm:$0xff]
    %v90 = vld [vmem:[%s3 + $0x10] sm:$0xff]
    %v91 = vld [vmem:[%s3 + $0x18] sm:$0xff]
    %v92 = vld [vmem:[%s3 + $0x20] sm:$0xff]
    %v93 = vld [vmem:[%s3 + $0x28] sm:$0xff]
    %v94 = vld [vmem:[%s3 + $0x30] sm:$0xff]
    %v95 = vld [vmem:[%s3 + $0x38] sm:$0xff]
    %v96 = vld [vmem:[%s4] sm:$0x1]
    %v98 = vperm.slane %v96, 0
    %vm100 = vcmask 523264
    %v102 = vsel %vm100, %v87, 0
    %104 = vmatpush.msra.mxu0 0.0
    %105 = vmatpush.msra.mxu0 0.0
    %106 = vmatpush.msra.mxu0 0.0
    %107 = vmatpush.msra.mxu0 0.0
    %108 = vmatpush.msra.mxu0 0.0
    %109 = vmatpush.msra.mxu0 0.0
    %110 = vmatpush.msra.mxu0 0.0
    %111 = vmatpush.msra.mxu0 0.0
    %112 = vmatpush.msra.mxu0 %v95
    %113 = vmatpush.msra.mxu0 %v94
    %114 = vmatpush.msra.mxu0 %v93
    %115 = vmatpush.msra.mxu0 %v92
    %116 = vmatpush.msra.mxu0 %v91
    %117 = vmatpush.msra.mxu0 %v90
    %118 = vmatpush.msra.mxu0 %v89
    %119 = vmatpush.msra.mxu0 %v88
    %120 = vmatmul.f32.gmra.mxu0 %v102
    %v121 = vpop.f32.mrf.mxu0
    %v122 = vadd.f32 %v98, %v121
    %123 = vdwg.mxu0
    %v124 = vmax.f32 %v122, 0.0
    %v125 = vld [vmem:[%s5] sm:$0xff]
    %v126 = vld [vmem:[%s5 + $0x8] sm:$0xff]
    %v127 = vld [vmem:[%s5 + $0x10] sm:$0xff]
    %v128 = vld [vmem:[%s5 + $0x18] sm:$0xff]
    %v129 = vld [vmem:[%s5 + $0x20] sm:$0xff]
    %v130 = vld [vmem:[%s5 + $0x28] sm:$0xff]
    %v131 = vld [vmem:[%s5 + $0x30] sm:$0xff]
    %v132 = vld [vmem:[%s5 + $0x38] sm:$0xff]
    %v133 = vld [vmem:[%s6] sm:$0x1]
    %v135 = vperm.slane %v133, 0
    %v138 = vsel %vm100, %v124, 0
    %140 = vmatpush.msra.mxu0 0.0
    %141 = vmatpush.msra.mxu0 0.0
    %142 = vmatpush.msra.mxu0 0.0
    %143 = vmatpush.msra.mxu0 0.0
    %144 = vmatpush.msra.mxu0 0.0
    %145 = vmatpush.msra.mxu0 0.0
    %146 = vmatpush.msra.mxu0 0.0
    %147 = vmatpush.msra.mxu0 0.0
    %148 = vmatpush.msra.mxu0 %v132
    %149 = vmatpush.msra.mxu0 %v131
    %150 = vmatpush.msra.mxu0 %v130
    %151 = vmatpush.msra.mxu0 %v129
    %152 = vmatpush.msra.mxu0 %v128
    %153 = vmatpush.msra.mxu0 %v127
    %154 = vmatpush.msra.mxu0 %v126
    %155 = vmatpush.msra.mxu0 %v125
    %156 = vmatmul.f32.gmra.mxu0 %v138
    %v157 = vpop.f32.mrf.mxu0
    %v158 = vadd.f32 %v135, %v157
    %159 = vdwg.mxu0
    %vm160 = vcmask 31744
    %161 = vst.msk [vmem:[%s7] sm:$0xff] %vm160, %v158
    // Predicated region
    $region38: #{tpu_custom_call.1} parent=1 // pred_check
      _
    $region39: #{tpu_custom_call.1} parent=1 // pred_check_branch
      %163 = sbr.rel (0) target = $region41
    $region40: #{tpu_custom_call.1} parent=1 // pred_region
      _
    $region41: #{tpu_custom_call.1} parent=1 // pred_fallthru
      _
    // Predicated region
    $region42: #{tpu_custom_call.1} parent=1 // pred_check
      _
    $region43: #{tpu_custom_call.1} parent=1 // pred_check_branch
      %165 = sbr.rel (0) target = $region45
    $region44: #{tpu_custom_call.1} parent=1 // pred_region
      _
    $region45: #{tpu_custom_call.1} parent=1 // pred_fallthru
      _
    %166 = vsyncpa [#allocation3], 1
    %167 = vsyncpa [#allocation5], 1

</llo_original>
